<compile_context>
chip_gen: v7x
topology: tpu7x:2x2x1
jax: 0.10.0
libtpu: 0.0.40
codegen_flags: <defaults>
</compile_context>

<pallas_src>
import jax
import jax.numpy as jnp
from jax.experimental import pallas as pl
from jax.experimental.pallas import tpu as pltpu


def _round_up(x, m):
    return -(-x // m) * m


def _choose_window_tile(n_win, C, H, K, stride, max_win_tile):
    """Pick the lane tile T (multiple of 128) over output windows."""
    T = max(128, _round_up(min(max(n_win, 1), max(max_win_tile, 128)), 128))
    # vreg guard: the (H, T) f32 matmul result should stay <= ~128 KiB.
    t_vreg = max(128, (128 * 1024 // (4 * max(H, 1))) // 128 * 128)
    T = min(T, t_vreg)
    # VMEM guard (v7x has 64 MiB/core; leave headroom for the BlockSpec
    # pipeline's double-buffering).
    try:
        vmem_cap = int(getattr(pltpu.get_tpu_info(), "vmem_capacity_bytes",
                               64 * 1024 * 1024))
    except Exception:
        vmem_cap = 64 * 1024 * 1024
    budget = vmem_cap // 4

    def footprint_bytes(t):
        win = t * stride
        elems = 2 * (C * win + C * 128 + H * t)   # double-buffered blocks
        elems += C * K * t                        # im2col scratch
        if stride > 1:
            elems += C * (win + 128)              # concat scratch
        elems += 2 * H * C * K                    # weights
        return 4 * elems

    while T > 128 and footprint_bytes(T) > budget:
        T -= 128
    return T


def _make_conv1d_kernel(C, H, K, T, stride):
    win = T * stride  # lane extent of one main x block

    if stride == 1:
        def kernel(w_ref, x0_ref, x1_ref, o_ref, im_ref):
            # w_ref:  (H, K*C)   folded weights, column index = k*C + c
            # x0_ref: (C, T)     main x block for this window tile
            # x1_ref: (C, 128)   halo strip = first 128 lanes of the next block
            # o_ref:  (H, T)
            # im_ref: (K*C, T)   VMEM im2col scratch
            x0 = x0_ref[...]
            x1 = x1_ref[...]
            for k in range(K):                      # K is small & static
                if k == 0:
                    tap = x0
                else:
                    tap = jnp.concatenate([x0[:, k:], x1[:, :k]], axis=1)
                im_ref[k * C:(k + 1) * C, :] = tap
            o_ref[...] = jnp.dot(
                w_ref[...], im_ref[...],
                preferred_element_type=jnp.float32).astype(o_ref.dtype)
        return kernel

    def kernel(w_ref, x0_ref, x1_ref, o_ref, im_ref, cat_ref):
        # cat_ref: (C, win + 128) = [main block | halo strip]
        cat_ref[:, 0:win] = x0_ref[...]
        cat_ref[:, win:win + 128] = x1_ref[...]
        for k in range(K):
            # one strided lane read per tap pulls every stride-th column
            im_ref[k * C:(k + 1) * C, :] = cat_ref[:, pl.ds(k, T, stride=stride)]
        o_ref[...] = jnp.dot(
            w_ref[...], im_ref[...],
            preferred_element_type=jnp.float32).astype(o_ref.dtype)

    return kernel


def conv1d_forward(x, kernel, stride, *, max_win_tile=4096):
    """Pallas 1D convolution matching the intended Conv1d.forward semantics."""
    B, C, L = x.shape
    _, H, Cw, K = kernel.shape
    assert C == Cw
    assert K <= 128, "halo strip covers at most 128 lanes"

    n_win = -(-L // stride)
    T = _choose_window_tile(n_win, C, H, K, stride, max_win_tile)
    n_tiles = -(-n_win // T)
    win = T * stride

    # Minimal zero pad: full main blocks plus one 128-lane halo strip past the
    # last block.  The zeros reproduce the reference's "window runs past the
    # end of the sequence" behavior; no other wrapper-side copies remain.
    L_pad = n_tiles * win + 128
    x_pad = jnp.pad(x, ((0, 0), (0, 0), (0, L_pad - L)))

    # Fold the K taps into the contraction dim: w2[h, k*C + c] = kernel[0,h,c,k]
    w2 = jnp.transpose(kernel[0], (0, 2, 1)).reshape(H, K * C).astype(x.dtype)

    kern = _make_conv1d_kernel(C, H, K, T, stride)
    scratch = [pltpu.VMEM((K * C, T), x.dtype)]
    if stride > 1:
        scratch.append(pltpu.VMEM((C, win + 128), x.dtype))

    itemsize = jnp.dtype(x.dtype).itemsize
    cost = pl.CostEstimate(
        flops=2 * B * H * C * K * n_win,
        transcendentals=0,
        bytes_accessed=(B * C * L_pad            # x main blocks (read once)
                        + B * n_tiles * C * 128  # halo strips
                        + H * C * K              # weights
                        + B * H * n_win          # output write
                        ) * itemsize,
    )

    halo_blk = win // 128   # halo strip index in units of 128-lane blocks

    # grid = (B, n_tiles), both parallel: shards across v7x's two TensorCores;
    # if B * n_tiles is ever tiny/odd, fold batch into the window axis.
    out = pl.pallas_call(
        kern,
        out_shape=jax.ShapeDtypeStruct((B, H, n_win), x.dtype),
        grid=(B, n_tiles),
        in_specs=[
            pl.BlockSpec((H, K * C), lambda b, t: (0, 0)),
            pl.BlockSpec((pl.Squeezed(), C, win), lambda b, t: (b, 0, t)),
            pl.BlockSpec((pl.Squeezed(), C, 128),
                         lambda b, t: (b, 0, (t + 1) * halo_blk)),
        ],
        out_specs=pl.BlockSpec((pl.Squeezed(), H, T), lambda b, t: (b, 0, t)),
        scratch_shapes=scratch,
        compiler_params=pltpu.CompilerParams(
            dimension_semantics=("parallel", "parallel")),
        cost_estimate=cost,
    )(w2, x_pad, x_pad)

    return out


def _conv1d_reference(x, kernel, stride):
    """Pure-JAX reference for the intended Conv1d semantics."""
    H, _, K = kernel.shape[1:]
    B, C, L = x.shape
    n_win = -(-L // stride)
    need = (n_win - 1) * stride + K
    xp = jnp.pad(x, ((0, 0), (0, 0), (0, max(0, need - L))))
    idx = jnp.arange(n_win)[:, None] * stride + jnp.arange(K)[None, :]
    return jnp.einsum("hck,bcjk->bhj", kernel[0], xp[:, :, idx])


def _run_case(key, *, B, C, H, K, stride, L, **kw):
    kx, kk = jax.random.split(key)
    x = jax.random.normal(kx, (B, C, L), dtype=jnp.float32)
    # deterministic stand-in for torch.rand((1, H, C, K))
    w = jax.random.uniform(kk, (1, H, C, K), dtype=jnp.float32)
    out = jax.block_until_ready(conv1d_forward(x, w, stride, **kw))
    ref = _conv1d_reference(x, w, stride)
    n_win = -(-L // stride)
    assert out.shape == (B, H, n_win), (out.shape, (B, H, n_win))
    assert jnp.allclose(out, ref, atol=1e-4, rtol=1e-4), \
        float(jnp.max(jnp.abs(out - ref)))


if __name__ == "__main__":
    k1, k2, k3 = jax.random.split(jax.random.PRNGKey(0), 3)
    # 1) module-sized case (stride=1: output length == sequence length)
    _run_case(k1, B=2, C=4, H=8, K=3, stride=1, L=16)
    # 2) multi-tile case: windows crossing tile edges exercise the 128-lane
    #    halo strip; n_win is not a multiple of 128 (ragged output tail).
    _run_case(k2, B=2, C=4, H=8, K=3, stride=1, L=300, max_win_tile=128)
    # 3) strided path (stride > 1), also multi-tile + halo.
    _run_case(k3, B=2, C=4, H=8, K=5, stride=2, L=300, max_win_tile=128)
    print("KERNEL_OK")
</pallas_src>

<mosaic_0001>
module attributes {stable_mosaic.version = 11 : i64} {
  func.func @kernel(%arg0: i32, %arg1: i32, %arg2: memref<8x12xf32, #tpu.memory_space<vmem>>, %arg3: memref<1x4x128xf32, #tpu.memory_space<vmem>>, %arg4: memref<1x4x128xf32, #tpu.memory_space<vmem>>, %arg5: memref<1x8x128xf32, #tpu.memory_space<vmem>>, %arg6: memref<12x128xf32, #tpu.memory_space<vmem>>) attributes {dimension_semantics = [#tpu.dimension_semantics<parallel>, #tpu.dimension_semantics<parallel>], iteration_bounds = array<i64: 2, 1>, scalar_prefetch = 0 : i64, scratch_operands = 1 : i64, tpu.core_type = #tpu.core_type<tc>, window_params = [{pipeline_mode = #tpu.pipeline_mode<synchronous>, transform_indices = @transform_0, window_bounds = array<i64: 8, 12>}, {transform_indices = @transform_1, window_bounds = array<i64: 1, 4, 128>}, {transform_indices = @transform_2, window_bounds = array<i64: 1, 4, 128>}, {transform_indices = @transform_3, window_bounds = array<i64: 1, 8, 128>}]} {
    %c0 = arith.constant 0 : index
    %c0_0 = arith.constant 0 : index
    %c0_1 = arith.constant 0 : index
    %0 = vector.load %arg3[%c0, %c0_0, %c0_1] : memref<1x4x128xf32, #tpu.memory_space<vmem>>, vector<1x4x128xf32>
    %1 = vector.shape_cast %0 : vector<1x4x128xf32> to vector<4x128xf32>
    %c0_2 = arith.constant 0 : index
    %c0_3 = arith.constant 0 : index
    %c0_4 = arith.constant 0 : index
    %2 = vector.load %arg4[%c0_2, %c0_3, %c0_4] : memref<1x4x128xf32, #tpu.memory_space<vmem>>, vector<1x4x128xf32>
    %3 = vector.shape_cast %2 : vector<1x4x128xf32> to vector<4x128xf32>
    %c0_5 = arith.constant 0 : index
    %c0_6 = arith.constant 0 : index
    %4 = vector.load %arg6[%c0_5, %c0_6] : memref<12x128xf32, #tpu.memory_space<vmem>>, vector<4x128xf32>
    tpu.vector_store %arg6[%c0_5, %c0_6], %1 {strides = array<i32>} : memref<12x128xf32, #tpu.memory_space<vmem>>, vector<4x128xf32>,
    %5 = vector.extract_strided_slice %1 {offsets = [0, 1], sizes = [4, 127], strides = [1, 1]} : vector<4x128xf32> to vector<4x127xf32>
    %6 = vector.extract_strided_slice %3 {offsets = [0, 0], sizes = [4, 1], strides = [1, 1]} : vector<4x128xf32> to vector<4x1xf32>
    %7 = tpu.concatenate %5, %6 in 1 : vector<4x127xf32>, vector<4x1xf32> -> vector<4x128xf32>
    %c4 = arith.constant 4 : index
    %c0_7 = arith.constant 0 : index
    %8 = vector.load %arg6[%c4, %c0_7] : memref<12x128xf32, #tpu.memory_space<vmem>>, vector<4x128xf32>
    tpu.vector_store %arg6[%c4, %c0_7], %7 {strides = array<i32>} : memref<12x128xf32, #tpu.memory_space<vmem>>, vector<4x128xf32>,
    %9 = vector.extract_strided_slice %1 {offsets = [0, 2], sizes = [4, 126], strides = [1, 1]} : vector<4x128xf32> to vector<4x126xf32>
    %10 = vector.extract_strided_slice %3 {offsets = [0, 0], sizes = [4, 2], strides = [1, 1]} : vector<4x128xf32> to vector<4x2xf32>
    %11 = tpu.concatenate %9, %10 in 1 : vector<4x126xf32>, vector<4x2xf32> -> vector<4x128xf32>
    %c8 = arith.constant 8 : index
    %c0_8 = arith.constant 0 : index
    %12 = vector.load %arg6[%c8, %c0_8] : memref<12x128xf32, #tpu.memory_space<vmem>>, vector<4x128xf32>
    tpu.vector_store %arg6[%c8, %c0_8], %11 {strides = array<i32>} : memref<12x128xf32, #tpu.memory_space<vmem>>, vector<4x128xf32>,
    %c0_9 = arith.constant 0 : index
    %c0_10 = arith.constant 0 : index
    %13 = vector.load %arg2[%c0_9, %c0_10] : memref<8x12xf32, #tpu.memory_space<vmem>>, vector<8x12xf32>
    %c0_11 = arith.constant 0 : index
    %c0_12 = arith.constant 0 : index
    %14 = vector.load %arg6[%c0_11, %c0_12] : memref<12x128xf32, #tpu.memory_space<vmem>>, vector<12x128xf32>
    %cst = arith.constant dense<0.000000e+00> : vector<8x128xf32>
    %15 = tpu.matmul %13, %14, %cst {dimension_numbers = #tpu.dot_dimension_numbers<[1], [0], [0], [1], [0, 0, 1, 1], [], []>} : vector<8x12xf32>, vector<12x128xf32>, vector<8x128xf32> -> vector<8x128xf32>
    %c0_13 = arith.constant 0 : index
    %c0_14 = arith.constant 0 : index
    %c0_15 = arith.constant 0 : index
    %16 = vector.load %arg5[%c0_13, %c0_14, %c0_15] : memref<1x8x128xf32, #tpu.memory_space<vmem>>, vector<1x8x128xf32>
    %17 = vector.shape_cast %16 : vector<1x8x128xf32> to vector<8x128xf32>
    %18 = vector.shape_cast %15 : vector<8x128xf32> to vector<1x8x128xf32>
    tpu.vector_store %arg5[%c0_13, %c0_14, %c0_15], %18 {strides = array<i32>} : memref<1x8x128xf32, #tpu.memory_space<vmem>>, vector<1x8x128xf32>,
    return
  }
  func.func @transform_0(%arg0: i32, %arg1: i32) -> (i32, i32) {
    %c0_i32 = arith.constant 0 : i32
    %c0_i32_0 = arith.constant 0 : i32
    %c0_i32_1 = arith.constant 0 : i32
    return %c0_i32, %c0_i32_0 : i32, i32
  }
  func.func @transform_1(%arg0: i32, %arg1: i32) -> (i32, i32, i32) {
    %c0_i32 = arith.constant 0 : i32
    %c0_i32_0 = arith.constant 0 : i32
    return %arg0, %c0_i32, %arg1 : i32, i32, i32
  }
  func.func @transform_2(%arg0: i32, %arg1: i32) -> (i32, i32, i32) {
    %c1_i32 = arith.constant 1 : i32
    %0 = arith.addi %arg1, %c1_i32 : i32
    %c1_i32_0 = arith.constant 1 : i32
    %1 = arith.muli %0, %c1_i32_0 : i32
    %c0_i32 = arith.constant 0 : i32
    %c0_i32_1 = arith.constant 0 : i32
    return %arg0, %c0_i32, %1 : i32, i32, i32
  }
  func.func @transform_3(%arg0: i32, %arg1: i32) -> (i32, i32, i32) {
    %c0_i32 = arith.constant 0 : i32
    %c0_i32_0 = arith.constant 0 : i32
    return %arg0, %c0_i32, %arg1 : i32, i32, i32
  }
}

</mosaic_0001>

<llo_original>
// kernel: tpu_custom_call.1
$region0: #{tpu_custom_call.1}
  #allocation0 [shape = 'u32[]', space=smem, size = 0x4, offset = 0x4, fixed_abs, tag = 'smem constant byte address 0x4 - core index']
  #allocation1 [shape = 'u32[144,128]{1,0:T(1,128)}', space=vmem, size = 0x12000, scoped, tag = 'internal scratch']
  #allocation2 [shape = 'f32[12,128]{1,0:T(8,128)}', space=vmem, size = 0x2000, scoped, tag = 'scratch operand']
  %s0 = inlined_call_operand.hbm [shape: f32[8,12], index: 0, kind: input, shape index: {}]
  %s1 = inlined_call_operand.hbm [shape: f32[2,4,256], index: 1, kind: input, shape index: {}]
  %s2 = inlined_call_operand.hbm [shape: f32[2,4,256], index: 2, kind: input, shape index: {}]
  %s3 = inlined_call_operand.hbm [shape: f32[2,8,16], index: 3, kind: output, shape index: {}]
  %s4 = sld [smem:[#allocation0]]
  $region57: #{tpu_custom_call.1} parent=0
    _
  %s6 = ssub.s32 1, %s4
  %s7 = scalar_select 0, %s6, %s4
  $region1: #{tpu_custom_call.1} parent=0
    #allocation3 [shape = 'u8[4096]{0}', space=vmem, size = 0x1000, scoped, tag = 'input window, operand 0, single buffered']
    #allocation4 [shape = 's32[2]{0}', space=sflag, size = 0x8, scoped, tag = 'scoped memory for tpu_custom_call.1']
    #allocation5 [shape = 's32[2]{0}', space=sflag, size = 0x8, scoped, tag = 'scoped memory for tpu_custom_call.1']
    #allocation6 [shape = 'u8[4096]{0}', space=vmem, size = 0x1000, scoped, tag = 'input window, operand 1']
    #allocation7 [shape = 's32[2]{0}', space=sflag, size = 0x8, scoped, tag = 'scoped memory for tpu_custom_call.1']
    #allocation8 [shape = 'u8[4096]{0}', space=vmem, size = 0x1000, scoped, tag = 'input window, operand 2']
    #allocation9 [shape = 'u8[8192]{0}', space=vmem, size = 0x2000, scoped, tag = 'output window, operand 0']
    %8 = vsyncpa [#allocation4], 0
    %9 = vsyncpa [#allocation7], 0
    %s10 = scalar_lea.sflag [#allocation7], 1
    %11 = vsyncpa %s10, 0
    %12 = vsyncpa [#allocation5], 0
    %s13 = scalar_lea.sflag [#allocation5], 1
    %14 = vsyncpa %s13, 0
    loop: start=0, step=1, limit=4
    $region2: #{tpu_custom_call.1} parent=1 // loop_pre_header
      _
    $region3: #{tpu_custom_call.1} parent=1 // loop_header
      %s16 = sphi 0, %s20
      %p17 = scmp.ge.s32.totalorder %s16, 4
      %s23 = sphi 0, %s35
      %s24 = sphi 0, %s31
      %s25 = sphi 0, %s23
      %s26 = sphi 0, %s24
      %s27 = sphi 0, %s25
      %s28 = sphi 0, %s26
      %s36 = sphi 0, %s36
      %s38 = sphi 0, %s36
      %s39 = sphi 0, %s38
      %s53 = sphi 0, %s39
      %s61 = sphi 0, %s63
      %s64 = sphi 0, %s61
      %s65 = sphi 0, %s64
      %s81 = sphi 0, %s65
      %s91 = sphi 0, %s93
      %s94 = sphi 0, %s91
      %s95 = sphi 0, %s94
      %s111 = sphi 0, %s95
      %s119 = sphi 0, %s121
      %s122 = sphi 0, %s119
      %s123 = sphi 0, %s122
      %s139 = sphi 0, %s123
    $region4: #{tpu_custom_call.1} parent=1 // loop_header_branch
      %19 = sbr.rel (%p17) target = $region8
    $region5: #{tpu_custom_call.1} parent=1 // loop_body
      %s21 = ssub.s32 %s16, 1
      %s22 = ssub.s32 %s16, 2
      %s29 = sadd.s32 1, %s24
      %p30 = scmp.ge.s32.totalorder %s29, 1
      %s31 = scalar_select %p30, 0, %s29
      %s32 = sadd.s32 1, %s23
      %s33 = scalar_select %p30, %s32, %s23
      %p34 = scmp.ge.s32.totalorder %s33, 2
      %s35 = scalar_select %p34, 0, %s33
      %s37 = sadd.s32 %s36, 1
      %p40 = scmp.eq.s32.totalorder %s16, 1
      %p41 = scmp.ne.s32.totalorder %s36, %s38
      %p42 = scmp.eq.s32.totalorder %s16, 0
      %p43 = por %p41, %p42
      %p44 = scmp.ne.s32.totalorder %s36, %s38
      %p45 = scmp.eq.s32.totalorder %s21, 1
      %p46 = por %p44, %p45
      %p47 = scmp.ne.s32.totalorder %s38, %s39
      %p48 = scmp.eq.s32.totalorder %s21, 0
      %p49 = por %p47, %p48
      %p50 = scmp.ne.s32.totalorder %s38, %s39
      %p51 = scmp.eq.s32.totalorder %s22, 1
      %p52 = por %p50, %p51
      %p54 = scmp.ne.s32.totalorder %s39, %s53
      %p55 = scmp.eq.s32.totalorder %s22, 0
      %p56 = por %p54, %p55
      %s57 = ssub.s32 %s23, %s35
      %s58 = ssub.s32 %s24, %s31
      %s59 = sor.u32 %s57, %s58
      %p60 = scmp.eq.s32.totalorder %s59, 0
      %s62 = sadd.s32 %s61, 1
      %s63 = scalar_select %p60, %s61, %s62
      %p66 = pneg %p60
      %p67 = scmp.eq.s32.totalorder %s16, 1
      %p68 = por %p66, %p67
      %p69 = scmp.ne.s32.totalorder %s61, %s64
      %p70 = scmp.eq.s32.totalorder %s16, 0
      %p71 = por %p69, %p70
      %p72 = scmp.ne.s32.totalorder %s61, %s64
      %p73 = scmp.eq.s32.totalorder %s21, 1
      %p74 = por %p72, %p73
      %p75 = scmp.ne.s32.totalorder %s64, %s65
      %p76 = scmp.eq.s32.totalorder %s21, 0
      %p77 = por %p75, %p76
      %p78 = scmp.ne.s32.totalorder %s64, %s65
      %p79 = scmp.eq.s32.totalorder %s22, 1
      %p80 = por %p78, %p79
      %p82 = scmp.ne.s32.totalorder %s65, %s81
      %p83 = scmp.eq.s32.totalorder %s22, 0
      %p84 = por %p82, %p83
      %s85 = sadd.s32 %s24, 1
      %s86 = sadd.s32 %s31, 1
      %s87 = ssub.s32 %s23, %s35
      %s88 = ssub.s32 %s85, %s86
      %s89 = sor.u32 %s87, %s88
      %p90 = scmp.eq.s32.totalorder %s89, 0
      %s92 = sadd.s32 %s91, 1
      %s93 = scalar_select %p90, %s91, %s92
      %p96 = pneg %p90
      %p97 = scmp.eq.s32.totalorder %s16, 1
      %p98 = por %p96, %p97
      %p99 = scmp.ne.s32.totalorder %s91, %s94
      %p100 = scmp.eq.s32.totalorder %s16, 0
      %p101 = por %p99, %p100
      %p102 = scmp.ne.s32.totalorder %s91, %s94
      %p103 = scmp.eq.s32.totalorder %s21, 1
      %p104 = por %p102, %p103
      %p105 = scmp.ne.s32.totalorder %s94, %s95
      %p106 = scmp.eq.s32.totalorder %s21, 0
      %p107 = por %p105, %p106
      %p108 = scmp.ne.s32.totalorder %s94, %s95
      %p109 = scmp.eq.s32.totalorder %s22, 1
      %p110 = por %p108, %p109
      %p112 = scmp.ne.s32.totalorder %s95, %s111
      %p113 = scmp.eq.s32.totalorder %s22, 0
      %p114 = por %p112, %p113
      %s115 = ssub.s32 %s23, %s35
      %s116 = ssub.s32 %s24, %s31
      %s117 = sor.u32 %s115, %s116
      %p118 = scmp.eq.s32.totalorder %s117, 0
      %s120 = sadd.s32 %s119, 1
      %s121 = scalar_select %p118, %s119, %s120
      %p124 = pneg %p118
      %p125 = scmp.eq.s32.totalorder %s16, 1
      %p126 = por %p124, %p125
      %p127 = scmp.ne.s32.totalorder %s119, %s122
      %p128 = scmp.eq.s32.totalorder %s16, 0
      %p129 = por %p127, %p128
      %p130 = scmp.ne.s32.totalorder %s119, %s122
      %p131 = scmp.eq.s32.totalorder %s21, 1
      %p132 = por %p130, %p131
      %p133 = scmp.ne.s32.totalorder %s122, %s123
      %p134 = scmp.eq.s32.totalorder %s21, 0
      %p135 = por %p133, %p134
      %p136 = scmp.ne.s32.totalorder %s122, %s123
      %p137 = scmp.eq.s32.totalorder %s22, 1
      %p138 = por %p136, %p137
      %p140 = scmp.ne.s32.totalorder %s123, %s139
      %p141 = scmp.eq.s32.totalorder %s22, 0
      %p142 = por %p140, %p141
      %p143 = scmp.le.s32.totalorder 1, %s16
      %p144 = scmp.lt.s32.totalorder %s16, 3
      %p145 = pnand %p143, %p144
      %p146 = pneg %p145
      // Predicated region
      $region9: #{tpu_custom_call.1} parent=5 // pred_check
        _
      $region10: #{tpu_custom_call.1} parent=5 // pred_check_branch
        %148 = sbr.rel (%p145) target = $region12
      $region11: #{tpu_custom_call.1} parent=5 // pred_region
        %s149 = ssub.s32 %s16, 1
        // Predicated region
        $region13: #{tpu_custom_call.1} parent=11 // pred_check
          %p150 = pneg %p49
        $region14: #{tpu_custom_call.1} parent=11 // pred_check_branch
          %152 = sbr.rel (%p150) target = $region16
        $region15: #{tpu_custom_call.1} parent=11 // pred_region
          %s154 = ssub.s32 128, 128
          %155 = vsyncadd [#allocation4], %s154
          %s157 = sshll.u32 [#allocation3], 4
          %s158 = int_to_ptr.vmem [resolvable:$true] %s157
          %160 = dma.hbm_to_vmem [thread:$0]  %s0, 128, %s158, [#allocation4]
        $region16: #{tpu_custom_call.1} parent=11 // pred_fallthru
          _
      $region12: #{tpu_custom_call.1} parent=5 // pred_fallthru
        _
      %p161 = scmp.lt.s32.totalorder %s16, 2
      // Predicated region
      $region17: #{tpu_custom_call.1} parent=5 // pred_check
        %p162 = pneg %p161
      $region18: #{tpu_custom_call.1} parent=5 // pred_check_branch
        %164 = sbr.rel (%p162) target = $region20
      $region19: #{tpu_custom_call.1} parent=5 // pred_region
        // Predicated region
        $region21: #{tpu_custom_call.1} parent=19 // pred_check
          %p165 = pneg %p71
        $region22: #{tpu_custom_call.1} parent=19 // pred_check_branch
          %167 = sbr.rel (%p165) target = $region24
        $region23: #{tpu_custom_call.1} parent=19 // pred_region
          %s168 = sand.u32 %s16, 1
          %s169 = scalar_lea.sflag [#allocation7], %s168
          %s170 = sand.u32 %s61, 1
          %s171 = smul.addr %s170, 4
          %s172 = scalar_lea.vmem [#allocation6], %s171
          %s174 = ssub.s32 64, 64
          %175 = vsyncadd %s169, %s174
          %s176 = smul.addr %s23, 2
          %s177 = sadd.s32 %s24, %s176
          %s178 = smul.addr %s177, 64
          %s179 = scalar_lea.hbm %s1, %s178
          %s181 = sshll.u32 %s172, 4
          %s182 = int_to_ptr.vmem [resolvable:$true] %s181
          %184 = dma.hbm_to_vmem [thread:$0]  %s179, 64, %s182, %s169
        $region24: #{tpu_custom_call.1} parent=19 // pred_fallthru
          _
        // Predicated region
        $region25: #{tpu_custom_call.1} parent=19 // pred_check
          %p185 = pneg %p101
        $region26: #{tpu_custom_call.1} parent=19 // pred_check_branch
          %187 = sbr.rel (%p185) target = $region28
        $region27: #{tpu_custom_call.1} parent=19 // pred_region
          %s188 = sand.u32 %s16, 1
          %s189 = scalar_lea.sflag [#allocation7], %s188
          %s190 = sand.u32 %s91, 1
          %s191 = smul.addr %s190, 4
          %s192 = scalar_lea.vmem [#allocation8], %s191
          %s193 = sadd.s32 %s24, 1
          %s195 = ssub.s32 64, 64
          %196 = vsyncadd %s189, %s195
          %s197 = smul.addr %s23, 2
          %s198 = sadd.s32 %s193, %s197
          %s199 = smul.addr %s198, 64
          %s200 = scalar_lea.hbm %s2, %s199
          %s202 = sshll.u32 %s192, 4
          %s203 = int_to_ptr.vmem [resolvable:$true] %s202
          %205 = dma.hbm_to_vmem [thread:$0]  %s200, 64, %s203, %s189
        $region28: #{tpu_custom_call.1} parent=19 // pred_fallthru
          _
      $region20: #{tpu_custom_call.1} parent=5 // pred_fallthru
        _
      %p206 = scmp.le.s32.totalorder 1, %s16
      %p207 = scmp.lt.s32.totalorder %s16, 3
      %p208 = pnand %p206, %p207
      %p209 = pneg %p208
      // Predicated region
      $region29: #{tpu_custom_call.1} parent=5 // pred_check
        _
      $region30: #{tpu_custom_call.1} parent=5 // pred_check_branch
        %211 = sbr.rel (%p208) target = $region32
      $region31: #{tpu_custom_call.1} parent=5 // pred_region
        %s212 = ssub.s32 %s16, 1
        // Predicated region
        $region33: #{tpu_custom_call.1} parent=31 // pred_check
          %p213 = pneg %p49
        $region34: #{tpu_custom_call.1} parent=31 // pred_check_branch
          %215 = sbr.rel (%p213) target = $region36
        $region35: #{tpu_custom_call.1} parent=31 // pred_region
          %216 = dma.done [#allocation4], 128
        $region36: #{tpu_custom_call.1} parent=31 // pred_fallthru
          _
        %s217 = sand.u32 %s21, 1
        %s218 = scalar_lea.sflag [#allocation7], %s217
        %s219 = sand.u32 %s64, 1
        %s220 = smul.addr %s219, 4
        %s221 = scalar_lea.vmem [#allocation6], %s220
        // Predicated region
        $region37: #{tpu_custom_call.1} parent=31 // pred_check
          %p222 = pneg %p77
        $region38: #{tpu_custom_call.1} parent=31 // pred_check_branch
          %224 = sbr.rel (%p222) target = $region40
        $region39: #{tpu_custom_call.1} parent=31 // pred_region
          %225 = dma.done %s218, 64
        $region40: #{tpu_custom_call.1} parent=31 // pred_fallthru
          _
        %s226 = sand.u32 %s21, 1
        %s227 = scalar_lea.sflag [#allocation7], %s226
        %s228 = sand.u32 %s94, 1
        %s229 = smul.addr %s228, 4
        %s230 = scalar_lea.vmem [#allocation8], %s229
        // Predicated region
        $region41: #{tpu_custom_call.1} parent=31 // pred_check
          %p231 = pneg %p107
        $region42: #{tpu_custom_call.1} parent=31 // pred_check_branch
          %233 = sbr.rel (%p231) target = $region44
        $region43: #{tpu_custom_call.1} parent=31 // pred_region
          %234 = dma.done %s227, 64
        $region44: #{tpu_custom_call.1} parent=31 // pred_fallthru
          _
        %p235 = pneg %p49
        %p236 = pneg %p46
        %s237 = sand.u32 %s21, 1
        %s238 = scalar_lea.sflag [#allocation7], %s237
        %s239 = sand.u32 %s64, 1
        %s240 = smul.addr %s239, 4
        %s241 = scalar_lea.vmem [#allocation6], %s240
        %p242 = pneg %p77
        %p243 = pneg %p74
        %s244 = sand.u32 %s21, 1
        %s245 = scalar_lea.sflag [#allocation7], %s244
        %s246 = sand.u32 %s94, 1
        %s247 = smul.addr %s246, 4
        %s248 = scalar_lea.vmem [#allocation8], %s247
        %p249 = pneg %p107
        %p250 = pneg %p104
        %p251 = pneg %p135
        %p252 = pneg %p132
        %s253 = sand.u32 %s122, 1
        %s254 = scalar_lea.sflag [#allocation5], %s253
        %s255 = sand.u32 %s122, 1
        %s256 = smul.addr %s255, 8
        %s257 = scalar_lea.vmem [#allocation9], %s256
        %s258 = sadd.s32 %s26, 1
        %v259 = vld [vmem:[%s221] sm:$0xf]
        %v260 = vld [vmem:[%s230] sm:$0xf]
        %261 = vst [vmem:[#allocation2] sm:$0xf] %v259
        %263 = vrot.lane.b32.xlu0 %v259, 127
        %v264 = vpop.permute.xlu0 %263
        %267 = vrot.lane.b32.xlu0 %v260, 127
        %v268 = vpop.permute.xlu0 %267
        %vm270 = vcmask 1039360
        %v271 = vsel %vm270, %v264, %v268
        %272 = vst [vmem:[#allocation2 + $0x4] sm:$0xf] %v271
        %273 = vrot.lane.b32.xlu0 %v259, 126
        %v274 = vpop.permute.xlu0 %273
        %276 = vrot.lane.b32.xlu0 %v260, 126
        %v277 = vpop.permute.xlu0 %276
        %vm279 = vcmask 1031168
        %v280 = vsel %vm279, %v274, %v277
        %281 = vst [vmem:[#allocation2 + $0x8] sm:$0xf] %v280
        %v282 = vld [vmem:[#allocation3] sm:$0xff]
        %v283 = vld [vmem:[#allocation2] sm:$0xff]
        %v284 = vld [vmem:[#allocation2 + $0x8] sm:$0xf]
        %vm285 = vcmask 97280
        %v287 = vsel %vm285, %v282, 0
        %vm289 = vcmask 1043456
        %v291 = vsel %vm289, %v284, 0
        %293 = vmatprep.subr.mxu0 0.0
        %294 = vmatpush1.msra.mxu0 %v283
        %295 = vmatprep.subr.mxu0 0.0
        %296 = vmatpush1.msra.mxu0 %v291
        %297 = vmatprep.subr.mxu0 0.0
        %298 = vmatpush1.msra.mxu0 0.0
        %299 = vmatprep.subr.mxu0 0.0
        %300 = vmatpush1.msra.mxu0 0.0
        %301 = vmatprep.subr.mxu0 0.0
        %302 = vmatpush1.msra.mxu0 0.0
        %303 = vmatprep.subr.mxu0 0.0
        %304 = vmatpush1.msra.mxu0 0.0
        %305 = vmatprep.subr.mxu0 0.0
        %306 = vmatpush1.msra.mxu0 0.0
        %307 = vmatprep.subr.mxu0 0.0
        %308 = vmatpush1.msra.mxu0 0.0
        %309 = vmatprep.subr.mxu0 0.0
        %310 = vmatpush1.msra.mxu0 0.0
        %311 = vmatprep.subr.mxu0 0.0
        %312 = vmatpush1.msra.mxu0 0.0
        %313 = vmatprep.subr.mxu0 0.0
        %314 = vmatpush1.msra.mxu0 0.0
        %315 = vmatprep.subr.mxu0 0.0
        %316 = vmatpush1.msra.mxu0 0.0
        %317 = vmatprep.subr.mxu0 0.0
        %318 = vmatpush1.msra.mxu0 0.0
        %319 = vmatprep.subr.mxu0 0.0
        %320 = vmatpush1.msra.mxu0 0.0
        %321 = vmatprep.subr.mxu0 0.0
        %322 = vmatpush1.msra.mxu0 0.0
        %323 = vmatprep.subr.mxu0 0.0
        %324 = vmatpush1.msra.mxu0 0.0
        %325 = vmatprep.subr.mxu0 0.0
        %326 = vmatpush1.msra.mxu0 0.0
        %327 = vmatprep.subr.mxu0 0.0
        %328 = vmatpush1.msra.mxu0 0.0
        %329 = vmatprep.subr.mxu0 0.0
        %330 = vmatpush1.msra.mxu0 0.0
        %331 = vmatprep.subr.mxu0 0.0
        %332 = vmatpush1.msra.mxu0 0.0
        %333 = vmatprep.subr.mxu0 0.0
        %334 = vmatpush1.msra.mxu0 0.0
        %335 = vmatprep.subr.mxu0 0.0
        %336 = vmatpush1.msra.mxu0 0.0
        %337 = vmatprep.subr.mxu0 0.0
        %338 = vmatpush1.msra.mxu0 0.0
        %339 = vmatprep.subr.mxu0 0.0
        %340 = vmatpush1.msra.mxu0 0.0
        %341 = vmatprep.subr.mxu0 0.0
        %342 = vmatpush1.msra.mxu0 0.0
        %343 = vmatprep.subr.mxu0 0.0
        %344 = vmatpush1.msra.mxu0 0.0
        %345 = vmatprep.subr.mxu0 0.0
        %346 = vmatpush1.msra.mxu0 0.0
        %347 = vmatprep.subr.mxu0 0.0
        %348 = vmatpush1.msra.mxu0 0.0
        %349 = vmatprep.subr.mxu0 0.0
        %350 = vmatpush1.msra.mxu0 0.0
        %351 = vmatprep.subr.mxu0 0.0
        %352 = vmatpush1.msra.mxu0 0.0
        %353 = vmatprep.subr.mxu0 0.0
        %354 = vmatpush1.msra.mxu0 0.0
        %355 = vmatprep.subr.mxu0 0.0
        %356 = vmatpush1.msra.mxu0 0.0
        %357 = vmatprep.mubr.f32.mxu0 0.0
        %358 = vmatmul.mubr.f32.gmra.mrb[0].mxu0 %v287
        %v359 = vpop.f32.mrb[0].mxu0
        %v360 = vadd.f32 0.0, %v359
        %v361 = vpop.f32.mrb[0].mxu0
        %362 = vdwg.mxu0
        %363 = vst [vmem:[%s257] sm:$0xff] %v360
        %s364 = sand.u32 %s122, 1
        %s365 = scalar_lea.sflag [#allocation5], %s364
        %s366 = sand.u32 %s122, 1
        %s367 = smul.addr %s366, 8
        %s368 = scalar_lea.vmem [#allocation9], %s367
        // Predicated region
        $region45: #{tpu_custom_call.1} parent=31 // pred_check
          %p369 = pneg %p132
        $region46: #{tpu_custom_call.1} parent=31 // pred_check_branch
          %371 = sbr.rel (%p369) target = $region48
        $region47: #{tpu_custom_call.1} parent=31 // pred_region
          %s373 = ssub.s32 128, 128
          %374 = vsyncadd %s365, %s373
          %s375 = sadd.s32 %s26, %s25
          %s376 = smul.addr %s375, 128
          %s377 = scalar_lea.hbm %s3, %s376
          %s379 = sshll.u32 %s368, 4
          %s380 = int_to_ptr.vmem [resolvable:$true] %s379
          %382 = dma.vmem_to_hbm [thread:$0]  %s380, 128, %s377, %s365
        $region48: #{tpu_custom_call.1} parent=31 // pred_fallthru
          _
      $region32: #{tpu_custom_call.1} parent=5 // pred_fallthru
        _
      %p383 = scmp.le.s32.totalorder 2, %s16
      // Predicated region
      $region49: #{tpu_custom_call.1} parent=5 // pred_check
        %p384 = pneg %p383
      $region50: #{tpu_custom_call.1} parent=5 // pred_check_branch
        %386 = sbr.rel (%p384) target = $region52
      $region51: #{tpu_custom_call.1} parent=5 // pred_region
        %s387 = ssub.s32 %s16, 2
        // Predicated region
        $region53: #{tpu_custom_call.1} parent=51 // pred_check
          %p388 = pneg %p138
        $region54: #{tpu_custom_call.1} parent=51 // pred_check_branch
          %390 = sbr.rel (%p388) target = $region56
        $region55: #{tpu_custom_call.1} parent=51 // pred_region
          %s391 = sand.u32 %s123, 1
          %s392 = scalar_lea.sflag [#allocation5], %s391
          %s393 = sand.u32 %s123, 1
          %s394 = smul.addr %s393, 8
          %s395 = scalar_lea.vmem [#allocation9], %s394
          %396 = dma.done %s392, 128
        $region56: #{tpu_custom_call.1} parent=51 // pred_fallthru
          _
      $region52: #{tpu_custom_call.1} parent=5 // pred_fallthru
        _
    $region6: #{tpu_custom_call.1} parent=1 // loop_footer
      %s20 = sadd.s32 1, %s16
    $region7: #{tpu_custom_call.1} parent=1 // loop_footer_branch
      %15 = sbr.rel target = $region3
    $region8: #{tpu_custom_call.1} parent=1 // loop_exit
      _
    %397 = vsyncpa [#allocation4], 1
    %s398 = scalar_lea.sflag [#allocation4], 1
    %399 = vsyncpa %s398, 1
    %400 = vsyncpa [#allocation7], 1
    %s401 = scalar_lea.sflag [#allocation7], 1
    %402 = vsyncpa %s401, 1
    %403 = vsyncpa [#allocation5], 1
    %s404 = scalar_lea.sflag [#allocation5], 1
    %405 = vsyncpa %s404, 1

</llo_original>
